<compile_context>
chip_gen: v6e
topology: v6e:2x2x1
jax: 0.10.0
libtpu: 0.0.40
codegen_flags: <defaults>
</compile_context>

<pallas_src>
import jax
import jax.numpy as jnp
from jax.experimental import pallas as pl
from jax.experimental.pallas import tpu as pltpu


def _smooth_kernel(x_ref, o_ref):
    # x_ref block: (H, W, TN)  channels-last (lane axis = channels)
    # o_ref block: (H, W, TN)
    x = x_ref[...].astype(jnp.float32)
    h = x.shape[0]
    w = x.shape[1]

    # Vertical pass with replication padding along the leading (H) axis:
    #   v[i] = xp[i] + 2*xp[i+1] + xp[i+2],  xp = edge-padded x.
    # Shifts along the leading axis are just different vregs -> no XLU cost.
    xp = jnp.concatenate([x[:1], x, x[-1:]], axis=0)              # (H+2, W, TN)
    v = xp[:h] + 2.0 * xp[1:h + 1] + xp[2:h + 2]                  # (H,   W, TN)

    # Horizontal pass with replication padding along the sublane (W) axis.
    vp = jnp.concatenate([v[:, :1], v, v[:, -1:]], axis=1)        # (H, W+2, TN)
    out = (vp[:, :w] + 2.0 * vp[:, 1:w + 1] + vp[:, 2:w + 2]) * 0.0625

    o_ref[...] = out.astype(o_ref.dtype)


def smooth(x: jax.Array) -> jax.Array:
    """Pallas equivalent of Smooth.forward for NCHW float input."""
    b, c, h, w = x.shape
    n = b * c
    dt = x.dtype
    itemsize = jnp.dtype(dt).itemsize

    # Channels-last layout so the lane axis carries B*C (lane-dense stores).
    xt = jnp.transpose(x.reshape(n, h, w), (1, 2, 0))             # (H, W, N)

    # Pick channel-chunk (lane) size TN: multiple of 128 when possible,
    # sized so one input block is ~2 MiB (f32 intermediates + double-buffered
    # in/out stay well under scoped VMEM on v5e/v6e/v7x).
    LANE = 128
    budget = 2 << 20
    per_chan = h * w * itemsize
    if n <= LANE:
        tn = n
    else:
        max_tn = max(LANE, ((budget // per_chan) // LANE) * LANE)
        tn = min(max_tn, pl.cdiv(n, LANE) * LANE)
    n_pad = pl.cdiv(n, tn) * tn
    if n_pad != n:
        xt = jnp.pad(xt, ((0, 0), (0, 0), (0, n_pad - n)))        # zero channels
    grid = (n_pad // tn,)
    # TODO(synk): for very large H*W (block > VMEM even at TN=128) add spatial
    # tiling along H with a 1-row replication halo.

    out = pl.pallas_call(
        _smooth_kernel,
        out_shape=jax.ShapeDtypeStruct((h, w, n_pad), dt),
        grid=grid,
        in_specs=[pl.BlockSpec((h, w, tn), lambda i: (0, 0, i))],
        out_specs=pl.BlockSpec((h, w, tn), lambda i: (0, 0, i)),
        compiler_params=pltpu.CompilerParams(
            dimension_semantics=("parallel",),
            vmem_limit_bytes=48 * 1024 * 1024,
        ),
        cost_estimate=pl.CostEstimate(
            flops=9 * h * w * n_pad,
            transcendentals=0,
            bytes_accessed=2 * h * w * n_pad * itemsize,
        ),
    )(xt)

    if n_pad != n:
        out = out[:, :, :n]                                       # drop channel pad
    return jnp.transpose(out, (2, 0, 1)).reshape(b, c, h, w)


def _reference(x: jax.Array) -> jax.Array:
    # Pure-JAX reference: replication pad + explicit 3x3 depthwise conv.
    b, c, h, w = x.shape
    k = jnp.array([[1.0, 2.0, 1.0], [2.0, 4.0, 2.0], [1.0, 2.0, 1.0]],
                  dtype=jnp.float32) / 16.0
    xpad = jnp.pad(x, ((0, 0), (0, 0), (1, 1), (1, 1)), mode="edge")
    out = jnp.zeros_like(x)
    for i in range(3):
        for j in range(3):
            out = out + k[i, j] * xpad[:, :, i:i + h, j:j + w]
    return out


if __name__ == "__main__":
    key = jax.random.PRNGKey(0)
    x = jax.random.normal(key, (2, 4, 16, 16), dtype=jnp.float32)

    y = smooth(x)
    jax.block_until_ready(y)

    ref = _reference(x)
    assert y.shape == x.shape and y.dtype == x.dtype
    assert jnp.allclose(y, ref, atol=1e-5, rtol=1e-5), "mismatch vs reference"

    print("KERNEL_OK")
</pallas_src>

<mosaic_0001>
module attributes {stable_mosaic.version = 11 : i64} {
  func.func @_smooth_kernel(%arg0: i32, %arg1: memref<16x16x8xf32, #tpu.memory_space<vmem>>, %arg2: memref<16x16x8xf32, #tpu.memory_space<vmem>>) attributes {dimension_semantics = [#tpu.dimension_semantics<parallel>], iteration_bounds = array<i64: 1>, scalar_prefetch = 0 : i64, scratch_operands = 0 : i64, tpu.core_type = #tpu.core_type<tc>, window_params = [{transform_indices = @transform_0, window_bounds = array<i64: 16, 16, 8>}, {transform_indices = @transform_1, window_bounds = array<i64: 16, 16, 8>}]} {
    %c0 = arith.constant 0 : index
    %c0_0 = arith.constant 0 : index
    %c0_1 = arith.constant 0 : index
    %0 = vector.load %arg1[%c0, %c0_0, %c0_1] : memref<16x16x8xf32, #tpu.memory_space<vmem>>, vector<16x16x8xf32>
    %1 = vector.extract_strided_slice %0 {offsets = [0, 0, 0], sizes = [1, 16, 8], strides = [1, 1, 1]} : vector<16x16x8xf32> to vector<1x16x8xf32>
    %2 = vector.extract_strided_slice %0 {offsets = [15, 0, 0], sizes = [1, 16, 8], strides = [1, 1, 1]} : vector<16x16x8xf32> to vector<1x16x8xf32>
    %3 = tpu.concatenate %1, %0, %2 in 0 : vector<1x16x8xf32>, vector<16x16x8xf32>, vector<1x16x8xf32> -> vector<18x16x8xf32>
    %4 = vector.extract_strided_slice %3 {offsets = [0, 0, 0], sizes = [16, 16, 8], strides = [1, 1, 1]} : vector<18x16x8xf32> to vector<16x16x8xf32>
    %5 = vector.extract_strided_slice %3 {offsets = [1, 0, 0], sizes = [16, 16, 8], strides = [1, 1, 1]} : vector<18x16x8xf32> to vector<16x16x8xf32>
    %cst = arith.constant 2.000000e+00 : f32
    %6 = vector.broadcast %cst : f32 to vector<16x16x8xf32>
    %7 = arith.mulf %6, %5 : vector<16x16x8xf32>
    %8 = arith.addf %4, %7 : vector<16x16x8xf32>
    %9 = vector.extract_strided_slice %3 {offsets = [2, 0, 0], sizes = [16, 16, 8], strides = [1, 1, 1]} : vector<18x16x8xf32> to vector<16x16x8xf32>
    %10 = arith.addf %8, %9 : vector<16x16x8xf32>
    %11 = vector.extract_strided_slice %10 {offsets = [0, 0, 0], sizes = [16, 1, 8], strides = [1, 1, 1]} : vector<16x16x8xf32> to vector<16x1x8xf32>
    %12 = vector.extract_strided_slice %10 {offsets = [0, 15, 0], sizes = [16, 1, 8], strides = [1, 1, 1]} : vector<16x16x8xf32> to vector<16x1x8xf32>
    %13 = tpu.concatenate %11, %10, %12 in 1 : vector<16x1x8xf32>, vector<16x16x8xf32>, vector<16x1x8xf32> -> vector<16x18x8xf32>
    %14 = vector.extract_strided_slice %13 {offsets = [0, 0, 0], sizes = [16, 16, 8], strides = [1, 1, 1]} : vector<16x18x8xf32> to vector<16x16x8xf32>
    %15 = vector.extract_strided_slice %13 {offsets = [0, 1, 0], sizes = [16, 16, 8], strides = [1, 1, 1]} : vector<16x18x8xf32> to vector<16x16x8xf32>
    %cst_2 = arith.constant 2.000000e+00 : f32
    %16 = vector.broadcast %cst_2 : f32 to vector<16x16x8xf32>
    %17 = arith.mulf %16, %15 : vector<16x16x8xf32>
    %18 = arith.addf %14, %17 : vector<16x16x8xf32>
    %19 = vector.extract_strided_slice %13 {offsets = [0, 2, 0], sizes = [16, 16, 8], strides = [1, 1, 1]} : vector<16x18x8xf32> to vector<16x16x8xf32>
    %20 = arith.addf %18, %19 : vector<16x16x8xf32>
    %cst_3 = arith.constant 6.250000e-02 : f32
    %21 = vector.broadcast %cst_3 : f32 to vector<16x16x8xf32>
    %22 = arith.mulf %20, %21 : vector<16x16x8xf32>
    %c0_4 = arith.constant 0 : index
    %c0_5 = arith.constant 0 : index
    %c0_6 = arith.constant 0 : index
    %23 = vector.load %arg2[%c0_4, %c0_5, %c0_6] : memref<16x16x8xf32, #tpu.memory_space<vmem>>, vector<16x16x8xf32>
    tpu.vector_store %arg2[%c0_4, %c0_5, %c0_6], %22 {strides = array<i32>} : memref<16x16x8xf32, #tpu.memory_space<vmem>>, vector<16x16x8xf32>,
    return
  }
  func.func @transform_0(%arg0: i32) -> (i32, i32, i32) {
    %c0_i32 = arith.constant 0 : i32
    %c0_i32_0 = arith.constant 0 : i32
    %c0_i32_1 = arith.constant 0 : i32
    return %c0_i32, %c0_i32_0, %arg0 : i32, i32, i32
  }
  func.func @transform_1(%arg0: i32) -> (i32, i32, i32) {
    %c0_i32 = arith.constant 0 : i32
    %c0_i32_0 = arith.constant 0 : i32
    %c0_i32_1 = arith.constant 0 : i32
    return %c0_i32, %c0_i32_0, %arg0 : i32, i32, i32
  }
}

</mosaic_0001>

<llo_original>
// kernel: tpu_custom_call.1
$region0: #{tpu_custom_call.1}
  #allocation0 [shape = 'u32[]', space=smem, size = 0x4, offset = 0x4, fixed_abs, tag = 'smem constant byte address 0x4 - core index']
  #allocation1 [shape = 'u32[144,128]{1,0:T(1,128)}', space=vmem, size = 0x12000, scoped, tag = 'internal scratch']
  %s0 = inlined_call_operand.vmem [shape: f32[16,16,8], index: 0, kind: input, shape index: {}]
  %s1 = inlined_call_operand.vmem [shape: f32[16,16,8], index: 1, kind: output, shape index: {}]
  %s2 = sld [smem:[#allocation0]]
  $region14: #{tpu_custom_call.1} parent=0
    _
  %s4 = ssub.s32 1, %s2
  %s5 = scalar_select 0, %s4, %s2
  // Predicated region
  $region2: #{tpu_custom_call.1} parent=0 // pred_check
    _
  $region3: #{tpu_custom_call.1} parent=0 // pred_check_branch
    %7 = sbr.rel (0) target = $region5
  $region4: #{tpu_custom_call.1} parent=0 // pred_region
    _
  $region5: #{tpu_custom_call.1} parent=0 // pred_fallthru
    _
  %v8 = vld [vmem:[%s0] sm:$0xff]
  %v9 = vld [vmem:[%s0 + $0x8] sm:$0xff]
  %v10 = vld [vmem:[%s0 + $0x10] sm:$0xff]
  %v11 = vld [vmem:[%s0 + $0x18] sm:$0xff]
  %v12 = vld [vmem:[%s0 + $0x20] sm:$0xff]
  %v13 = vld [vmem:[%s0 + $0x28] sm:$0xff]
  %v14 = vld [vmem:[%s0 + $0x30] sm:$0xff]
  %v15 = vld [vmem:[%s0 + $0x38] sm:$0xff]
  %v16 = vld [vmem:[%s0 + $0x40] sm:$0xff]
  %v17 = vld [vmem:[%s0 + $0x48] sm:$0xff]
  %v18 = vld [vmem:[%s0 + $0x50] sm:$0xff]
  %v19 = vld [vmem:[%s0 + $0x58] sm:$0xff]
  %v20 = vld [vmem:[%s0 + $0x60] sm:$0xff]
  %v21 = vld [vmem:[%s0 + $0x68] sm:$0xff]
  %v22 = vld [vmem:[%s0 + $0x70] sm:$0xff]
  %v23 = vld [vmem:[%s0 + $0x78] sm:$0xff]
  %v24 = vld [vmem:[%s0 + $0x80] sm:$0xff]
  %v25 = vld [vmem:[%s0 + $0x88] sm:$0xff]
  %v26 = vld [vmem:[%s0 + $0x90] sm:$0xff]
  %v27 = vld [vmem:[%s0 + $0x98] sm:$0xff]
  %v28 = vld [vmem:[%s0 + $0xa0] sm:$0xff]
  %v29 = vld [vmem:[%s0 + $0xa8] sm:$0xff]
  %v30 = vld [vmem:[%s0 + $0xb0] sm:$0xff]
  %v31 = vld [vmem:[%s0 + $0xb8] sm:$0xff]
  %v32 = vld [vmem:[%s0 + $0xc0] sm:$0xff]
  %v33 = vld [vmem:[%s0 + $0xc8] sm:$0xff]
  %v34 = vld [vmem:[%s0 + $0xd0] sm:$0xff]
  %v35 = vld [vmem:[%s0 + $0xd8] sm:$0xff]
  %v36 = vld [vmem:[%s0 + $0xe0] sm:$0xff]
  %v37 = vld [vmem:[%s0 + $0xe8] sm:$0xff]
  %v38 = vld [vmem:[%s0 + $0xf0] sm:$0xff]
  %v39 = vld [vmem:[%s0 + $0xf8] sm:$0xff]
  %v40 = vmul.f32 %v8, 2.0
  %v41 = vmul.f32 %v9, 2.0
  %v42 = vmul.f32 %v10, 2.0
  %v43 = vmul.f32 %v11, 2.0
  %v44 = vmul.f32 %v12, 2.0
  %v45 = vmul.f32 %v13, 2.0
  %v46 = vmul.f32 %v14, 2.0
  %v47 = vmul.f32 %v15, 2.0
  %v48 = vmul.f32 %v16, 2.0
  %v49 = vmul.f32 %v17, 2.0
  %v50 = vmul.f32 %v18, 2.0
  %v51 = vmul.f32 %v19, 2.0
  %v52 = vmul.f32 %v20, 2.0
  %v53 = vmul.f32 %v21, 2.0
  %v54 = vmul.f32 %v22, 2.0
  %v55 = vmul.f32 %v23, 2.0
  %v56 = vmul.f32 %v24, 2.0
  %v57 = vmul.f32 %v25, 2.0
  %v58 = vmul.f32 %v26, 2.0
  %v59 = vmul.f32 %v27, 2.0
  %v60 = vmul.f32 %v28, 2.0
  %v61 = vmul.f32 %v29, 2.0
  %v62 = vmul.f32 %v30, 2.0
  %v63 = vmul.f32 %v31, 2.0
  %v64 = vmul.f32 %v32, 2.0
  %v65 = vmul.f32 %v33, 2.0
  %v66 = vmul.f32 %v34, 2.0
  %v67 = vmul.f32 %v35, 2.0
  %v68 = vmul.f32 %v36, 2.0
  %v69 = vmul.f32 %v37, 2.0
  %v70 = vmul.f32 %v38, 2.0
  %v71 = vmul.f32 %v39, 2.0
  %v72 = vadd.f32 %v8, %v40
  %v73 = vadd.f32 %v9, %v41
  %v74 = vadd.f32 %v8, %v42
  %v75 = vadd.f32 %v9, %v43
  %v76 = vadd.f32 %v10, %v44
  %v77 = vadd.f32 %v11, %v45
  %v78 = vadd.f32 %v12, %v46
  %v79 = vadd.f32 %v13, %v47
  %v80 = vadd.f32 %v14, %v48
  %v81 = vadd.f32 %v15, %v49
  %v82 = vadd.f32 %v16, %v50
  %v83 = vadd.f32 %v17, %v51
  %v84 = vadd.f32 %v18, %v52
  %v85 = vadd.f32 %v19, %v53
  %v86 = vadd.f32 %v20, %v54
  %v87 = vadd.f32 %v21, %v55
  %v88 = vadd.f32 %v22, %v56
  %v89 = vadd.f32 %v23, %v57
  %v90 = vadd.f32 %v24, %v58
  %v91 = vadd.f32 %v25, %v59
  %v92 = vadd.f32 %v26, %v60
  %v93 = vadd.f32 %v27, %v61
  %v94 = vadd.f32 %v28, %v62
  %v95 = vadd.f32 %v29, %v63
  %v96 = vadd.f32 %v30, %v64
  %v97 = vadd.f32 %v31, %v65
  %v98 = vadd.f32 %v32, %v66
  %v99 = vadd.f32 %v33, %v67
  %v100 = vadd.f32 %v34, %v68
  %v101 = vadd.f32 %v35, %v69
  %v102 = vadd.f32 %v36, %v70
  %v103 = vadd.f32 %v37, %v71
  %v104 = vadd.f32 %v72, %v10
  %v105 = vadd.f32 %v73, %v11
  %v106 = vadd.f32 %v74, %v12
  %v107 = vadd.f32 %v75, %v13
  %v108 = vadd.f32 %v76, %v14
  %v109 = vadd.f32 %v77, %v15
  %v110 = vadd.f32 %v78, %v16
  %v111 = vadd.f32 %v79, %v17
  %v112 = vadd.f32 %v80, %v18
  %v113 = vadd.f32 %v81, %v19
  %v114 = vadd.f32 %v82, %v20
  %v115 = vadd.f32 %v83, %v21
  %v116 = vadd.f32 %v84, %v22
  %v117 = vadd.f32 %v85, %v23
  %v118 = vadd.f32 %v86, %v24
  %v119 = vadd.f32 %v87, %v25
  %v120 = vadd.f32 %v88, %v26
  %v121 = vadd.f32 %v89, %v27
  %v122 = vadd.f32 %v90, %v28
  %v123 = vadd.f32 %v91, %v29
  %v124 = vadd.f32 %v92, %v30
  %v125 = vadd.f32 %v93, %v31
  %v126 = vadd.f32 %v94, %v32
  %v127 = vadd.f32 %v95, %v33
  %v128 = vadd.f32 %v96, %v34
  %v129 = vadd.f32 %v97, %v35
  %v130 = vadd.f32 %v98, %v36
  %v131 = vadd.f32 %v99, %v37
  %v132 = vadd.f32 %v100, %v38
  %v133 = vadd.f32 %v101, %v39
  %v134 = vadd.f32 %v102, %v38
  %v135 = vadd.f32 %v103, %v39
  %vm168 = vcmask 1040384
  %v169 = vrot.slane %v104, 7
  %v170 = vrot.slane %v105, 7
  %v171 = vsel %vm168, %v169, %v170
  %v172 = vrot.slane %v106, 7
  %v173 = vrot.slane %v107, 7
  %v174 = vsel %vm168, %v172, %v173
  %v175 = vrot.slane %v108, 7
  %v176 = vrot.slane %v109, 7
  %v177 = vsel %vm168, %v175, %v176
  %v178 = vrot.slane %v110, 7
  %v179 = vrot.slane %v111, 7
  %v180 = vsel %vm168, %v178, %v179
  %v181 = vrot.slane %v112, 7
  %v182 = vrot.slane %v113, 7
  %v183 = vsel %vm168, %v181, %v182
  %v184 = vrot.slane %v114, 7
  %v185 = vrot.slane %v115, 7
  %v186 = vsel %vm168, %v184, %v185
  %v187 = vrot.slane %v116, 7
  %v188 = vrot.slane %v117, 7
  %v189 = vsel %vm168, %v187, %v188
  %v190 = vrot.slane %v118, 7
  %v191 = vrot.slane %v119, 7
  %v192 = vsel %vm168, %v190, %v191
  %v193 = vrot.slane %v120, 7
  %v194 = vrot.slane %v121, 7
  %v195 = vsel %vm168, %v193, %v194
  %v196 = vrot.slane %v122, 7
  %v197 = vrot.slane %v123, 7
  %v198 = vsel %vm168, %v196, %v197
  %v199 = vrot.slane %v124, 7
  %v200 = vrot.slane %v125, 7
  %v201 = vsel %vm168, %v199, %v200
  %v202 = vrot.slane %v126, 7
  %v203 = vrot.slane %v127, 7
  %v204 = vsel %vm168, %v202, %v203
  %v205 = vrot.slane %v128, 7
  %v206 = vrot.slane %v129, 7
  %v207 = vsel %vm168, %v205, %v206
  %v208 = vrot.slane %v130, 7
  %v209 = vrot.slane %v131, 7
  %v210 = vsel %vm168, %v208, %v209
  %v211 = vrot.slane %v132, 7
  %v212 = vrot.slane %v133, 7
  %v213 = vsel %vm168, %v211, %v212
  %v214 = vrot.slane %v134, 7
  %v215 = vrot.slane %v135, 7
  %v216 = vsel %vm168, %v214, %v215
  %v265 = vrot.slane %v105, 6
  %v266 = vrot.slane %v107, 6
  %v267 = vrot.slane %v109, 6
  %v268 = vrot.slane %v111, 6
  %v269 = vrot.slane %v113, 6
  %v270 = vrot.slane %v115, 6
  %v271 = vrot.slane %v117, 6
  %v272 = vrot.slane %v119, 6
  %v273 = vrot.slane %v121, 6
  %v274 = vrot.slane %v123, 6
  %v275 = vrot.slane %v125, 6
  %v276 = vrot.slane %v127, 6
  %v277 = vrot.slane %v129, 6
  %v278 = vrot.slane %v131, 6
  %v279 = vrot.slane %v133, 6
  %v280 = vrot.slane %v135, 6
  %v297 = vsel %vm168, %v104, %v169
  %v298 = vsel %vm168, %v106, %v172
  %v299 = vsel %vm168, %v108, %v175
  %v300 = vsel %vm168, %v110, %v178
  %v301 = vsel %vm168, %v112, %v181
  %v302 = vsel %vm168, %v114, %v184
  %v303 = vsel %vm168, %v116, %v187
  %v304 = vsel %vm168, %v118, %v190
  %v305 = vsel %vm168, %v120, %v193
  %v306 = vsel %vm168, %v122, %v196
  %v307 = vsel %vm168, %v124, %v199
  %v308 = vsel %vm168, %v126, %v202
  %v309 = vsel %vm168, %v128, %v205
  %v310 = vsel %vm168, %v130, %v208
  %v311 = vsel %vm168, %v132, %v211
  %v312 = vsel %vm168, %v134, %v214
  %v313 = vsel %vm168, %v170, %v265
  %v314 = vsel %vm168, %v173, %v266
  %v315 = vsel %vm168, %v176, %v267
  %v316 = vsel %vm168, %v179, %v268
  %v317 = vsel %vm168, %v182, %v269
  %v318 = vsel %vm168, %v185, %v270
  %v319 = vsel %vm168, %v188, %v271
  %v320 = vsel %vm168, %v191, %v272
  %v321 = vsel %vm168, %v194, %v273
  %v322 = vsel %vm168, %v197, %v274
  %v323 = vsel %vm168, %v200, %v275
  %v324 = vsel %vm168, %v203, %v276
  %v325 = vsel %vm168, %v206, %v277
  %v326 = vsel %vm168, %v209, %v278
  %v327 = vsel %vm168, %v212, %v279
  %v328 = vsel %vm168, %v215, %v280
  %v329 = vmul.f32 %v297, 2.0
  %v330 = vmul.f32 %v171, 2.0
  %v331 = vmul.f32 %v313, 2.0
  %v332 = vmul.f32 %v298, 2.0
  %v333 = vmul.f32 %v174, 2.0
  %v334 = vmul.f32 %v314, 2.0
  %v335 = vmul.f32 %v299, 2.0
  %v336 = vmul.f32 %v177, 2.0
  %v337 = vmul.f32 %v315, 2.0
  %v338 = vmul.f32 %v300, 2.0
  %v339 = vmul.f32 %v180, 2.0
  %v340 = vmul.f32 %v316, 2.0
  %v341 = vmul.f32 %v301, 2.0
  %v342 = vmul.f32 %v183, 2.0
  %v343 = vmul.f32 %v317, 2.0
  %v344 = vmul.f32 %v302, 2.0
  %v345 = vmul.f32 %v186, 2.0
  %v346 = vmul.f32 %v318, 2.0
  %v347 = vmul.f32 %v303, 2.0
  %v348 = vmul.f32 %v189, 2.0
  %v349 = vmul.f32 %v319, 2.0
  %v350 = vmul.f32 %v304, 2.0
  %v351 = vmul.f32 %v192, 2.0
  %v352 = vmul.f32 %v320, 2.0
  %v353 = vmul.f32 %v305, 2.0
  %v354 = vmul.f32 %v195, 2.0
  %v355 = vmul.f32 %v321, 2.0
  %v356 = vmul.f32 %v306, 2.0
  %v357 = vmul.f32 %v198, 2.0
  %v358 = vmul.f32 %v322, 2.0
  %v359 = vmul.f32 %v307, 2.0
  %v360 = vmul.f32 %v201, 2.0
  %v361 = vmul.f32 %v323, 2.0
  %v362 = vmul.f32 %v308, 2.0
  %v363 = vmul.f32 %v204, 2.0
  %v364 = vmul.f32 %v324, 2.0
  %v365 = vmul.f32 %v309, 2.0
  %v366 = vmul.f32 %v207, 2.0
  %v367 = vmul.f32 %v325, 2.0
  %v368 = vmul.f32 %v310, 2.0
  %v369 = vmul.f32 %v210, 2.0
  %v370 = vmul.f32 %v326, 2.0
  %v371 = vmul.f32 %v311, 2.0
  %v372 = vmul.f32 %v213, 2.0
  %v373 = vmul.f32 %v327, 2.0
  %v374 = vmul.f32 %v312, 2.0
  %v375 = vmul.f32 %v216, 2.0
  %v376 = vmul.f32 %v328, 2.0
  %vm425 = vcmask 1046528
  %v426 = vrot.slane %v329, 1
  %v427 = vrot.slane %v330, 1
  %v428 = vsel %vm425, %v426, %v427
  %v429 = vrot.slane %v331, 1
  %v430 = vsel %vm425, %v427, %v429
  %v431 = vrot.slane %v332, 1
  %v432 = vrot.slane %v333, 1
  %v433 = vsel %vm425, %v431, %v432
  %v434 = vrot.slane %v334, 1
  %v435 = vsel %vm425, %v432, %v434
  %v436 = vrot.slane %v335, 1
  %v437 = vrot.slane %v336, 1
  %v438 = vsel %vm425, %v436, %v437
  %v439 = vrot.slane %v337, 1
  %v440 = vsel %vm425, %v437, %v439
  %v441 = vrot.slane %v338, 1
  %v442 = vrot.slane %v339, 1
  %v443 = vsel %vm425, %v441, %v442
  %v444 = vrot.slane %v340, 1
  %v445 = vsel %vm425, %v442, %v444
  %v446 = vrot.slane %v341, 1
  %v447 = vrot.slane %v342, 1
  %v448 = vsel %vm425, %v446, %v447
  %v449 = vrot.slane %v343, 1
  %v450 = vsel %vm425, %v447, %v449
  %v451 = vrot.slane %v344, 1
  %v452 = vrot.slane %v345, 1
  %v453 = vsel %vm425, %v451, %v452
  %v454 = vrot.slane %v346, 1
  %v455 = vsel %vm425, %v452, %v454
  %v456 = vrot.slane %v347, 1
  %v457 = vrot.slane %v348, 1
  %v458 = vsel %vm425, %v456, %v457
  %v459 = vrot.slane %v349, 1
  %v460 = vsel %vm425, %v457, %v459
  %v461 = vrot.slane %v350, 1
  %v462 = vrot.slane %v351, 1
  %v463 = vsel %vm425, %v461, %v462
  %v464 = vrot.slane %v352, 1
  %v465 = vsel %vm425, %v462, %v464
  %v466 = vrot.slane %v353, 1
  %v467 = vrot.slane %v354, 1
  %v468 = vsel %vm425, %v466, %v467
  %v469 = vrot.slane %v355, 1
  %v470 = vsel %vm425, %v467, %v469
  %v471 = vrot.slane %v356, 1
  %v472 = vrot.slane %v357, 1
  %v473 = vsel %vm425, %v471, %v472
  %v474 = vrot.slane %v358, 1
  %v475 = vsel %vm425, %v472, %v474
  %v476 = vrot.slane %v359, 1
  %v477 = vrot.slane %v360, 1
  %v478 = vsel %vm425, %v476, %v477
  %v479 = vrot.slane %v361, 1
  %v480 = vsel %vm425, %v477, %v479
  %v481 = vrot.slane %v362, 1
  %v482 = vrot.slane %v363, 1
  %v483 = vsel %vm425, %v481, %v482
  %v484 = vrot.slane %v364, 1
  %v485 = vsel %vm425, %v482, %v484
  %v486 = vrot.slane %v365, 1
  %v487 = vrot.slane %v366, 1
  %v488 = vsel %vm425, %v486, %v487
  %v489 = vrot.slane %v367, 1
  %v490 = vsel %vm425, %v487, %v489
  %v491 = vrot.slane %v368, 1
  %v492 = vrot.slane %v369, 1
  %v493 = vsel %vm425, %v491, %v492
  %v494 = vrot.slane %v370, 1
  %v495 = vsel %vm425, %v492, %v494
  %v496 = vrot.slane %v371, 1
  %v497 = vrot.slane %v372, 1
  %v498 = vsel %vm425, %v496, %v497
  %v499 = vrot.slane %v373, 1
  %v500 = vsel %vm425, %v497, %v499
  %v501 = vrot.slane %v374, 1
  %v502 = vrot.slane %v375, 1
  %v503 = vsel %vm425, %v501, %v502
  %v504 = vrot.slane %v376, 1
  %v505 = vsel %vm425, %v502, %v504
  %v538 = vadd.f32 %v297, %v428
  %v539 = vadd.f32 %v171, %v430
  %v540 = vadd.f32 %v298, %v433
  %v541 = vadd.f32 %v174, %v435
  %v542 = vadd.f32 %v299, %v438
  %v543 = vadd.f32 %v177, %v440
  %v544 = vadd.f32 %v300, %v443
  %v545 = vadd.f32 %v180, %v445
  %v546 = vadd.f32 %v301, %v448
  %v547 = vadd.f32 %v183, %v450
  %v548 = vadd.f32 %v302, %v453
  %v549 = vadd.f32 %v186, %v455
  %v550 = vadd.f32 %v303, %v458
  %v551 = vadd.f32 %v189, %v460
  %v552 = vadd.f32 %v304, %v463
  %v553 = vadd.f32 %v192, %v465
  %v554 = vadd.f32 %v305, %v468
  %v555 = vadd.f32 %v195, %v470
  %v556 = vadd.f32 %v306, %v473
  %v557 = vadd.f32 %v198, %v475
  %v558 = vadd.f32 %v307, %v478
  %v559 = vadd.f32 %v201, %v480
  %v560 = vadd.f32 %v308, %v483
  %v561 = vadd.f32 %v204, %v485
  %v562 = vadd.f32 %v309, %v488
  %v563 = vadd.f32 %v207, %v490
  %v564 = vadd.f32 %v310, %v493
  %v565 = vadd.f32 %v210, %v495
  %v566 = vadd.f32 %v311, %v498
  %v567 = vadd.f32 %v213, %v500
  %v568 = vadd.f32 %v312, %v503
  %v569 = vadd.f32 %v216, %v505
  %vm602 = vcmask 1045504
  %v603 = vrot.slane %v297, 2
  %v604 = vrot.slane %v171, 2
  %v605 = vsel %vm602, %v603, %v604
  %v606 = vrot.slane %v313, 2
  %v607 = vsel %vm602, %v604, %v606
  %v608 = vrot.slane %v298, 2
  %v609 = vrot.slane %v174, 2
  %v610 = vsel %vm602, %v608, %v609
  %v611 = vrot.slane %v314, 2
  %v612 = vsel %vm602, %v609, %v611
  %v613 = vrot.slane %v299, 2
  %v614 = vrot.slane %v177, 2
  %v615 = vsel %vm602, %v613, %v614
  %v616 = vrot.slane %v315, 2
  %v617 = vsel %vm602, %v614, %v616
  %v618 = vrot.slane %v300, 2
  %v619 = vrot.slane %v180, 2
  %v620 = vsel %vm602, %v618, %v619
  %v621 = vrot.slane %v316, 2
  %v622 = vsel %vm602, %v619, %v621
  %v623 = vrot.slane %v301, 2
  %v624 = vrot.slane %v183, 2
  %v625 = vsel %vm602, %v623, %v624
  %v626 = vrot.slane %v317, 2
  %v627 = vsel %vm602, %v624, %v626
  %v628 = vrot.slane %v302, 2
  %v629 = vrot.slane %v186, 2
  %v630 = vsel %vm602, %v628, %v629
  %v631 = vrot.slane %v318, 2
  %v632 = vsel %vm602, %v629, %v631
  %v633 = vrot.slane %v303, 2
  %v634 = vrot.slane %v189, 2
  %v635 = vsel %vm602, %v633, %v634
  %v636 = vrot.slane %v319, 2
  %v637 = vsel %vm602, %v634, %v636
  %v638 = vrot.slane %v304, 2
  %v639 = vrot.slane %v192, 2
  %v640 = vsel %vm602, %v638, %v639
  %v641 = vrot.slane %v320, 2
  %v642 = vsel %vm602, %v639, %v641
  %v643 = vrot.slane %v305, 2
  %v644 = vrot.slane %v195, 2
  %v645 = vsel %vm602, %v643, %v644
  %v646 = vrot.slane %v321, 2
  %v647 = vsel %vm602, %v644, %v646
  %v648 = vrot.slane %v306, 2
  %v649 = vrot.slane %v198, 2
  %v650 = vsel %vm602, %v648, %v649
  %v651 = vrot.slane %v322, 2
  %v652 = vsel %vm602, %v649, %v651
  %v653 = vrot.slane %v307, 2
  %v654 = vrot.slane %v201, 2
  %v655 = vsel %vm602, %v653, %v654
  %v656 = vrot.slane %v323, 2
  %v657 = vsel %vm602, %v654, %v656
  %v658 = vrot.slane %v308, 2
  %v659 = vrot.slane %v204, 2
  %v660 = vsel %vm602, %v658, %v659
  %v661 = vrot.slane %v324, 2
  %v662 = vsel %vm602, %v659, %v661
  %v663 = vrot.slane %v309, 2
  %v664 = vrot.slane %v207, 2
  %v665 = vsel %vm602, %v663, %v664
  %v666 = vrot.slane %v325, 2
  %v667 = vsel %vm602, %v664, %v666
  %v668 = vrot.slane %v310, 2
  %v669 = vrot.slane %v210, 2
  %v670 = vsel %vm602, %v668, %v669
  %v671 = vrot.slane %v326, 2
  %v672 = vsel %vm602, %v669, %v671
  %v673 = vrot.slane %v311, 2
  %v674 = vrot.slane %v213, 2
  %v675 = vsel %vm602, %v673, %v674
  %v676 = vrot.slane %v327, 2
  %v677 = vsel %vm602, %v674, %v676
  %v678 = vrot.slane %v312, 2
  %v679 = vrot.slane %v216, 2
  %v680 = vsel %vm602, %v678, %v679
  %v681 = vrot.slane %v328, 2
  %v682 = vsel %vm602, %v679, %v681
  %v715 = vadd.f32 %v538, %v605
  %v716 = vadd.f32 %v539, %v607
  %v717 = vadd.f32 %v540, %v610
  %v718 = vadd.f32 %v541, %v612
  %v719 = vadd.f32 %v542, %v615
  %v720 = vadd.f32 %v543, %v617
  %v721 = vadd.f32 %v544, %v620
  %v722 = vadd.f32 %v545, %v622
  %v723 = vadd.f32 %v546, %v625
  %v724 = vadd.f32 %v547, %v627
  %v725 = vadd.f32 %v548, %v630
  %v726 = vadd.f32 %v549, %v632
  %v727 = vadd.f32 %v550, %v635
  %v728 = vadd.f32 %v551, %v637
  %v729 = vadd.f32 %v552, %v640
  %v730 = vadd.f32 %v553, %v642
  %v731 = vadd.f32 %v554, %v645
  %v732 = vadd.f32 %v555, %v647
  %v733 = vadd.f32 %v556, %v650
  %v734 = vadd.f32 %v557, %v652
  %v735 = vadd.f32 %v558, %v655
  %v736 = vadd.f32 %v559, %v657
  %v737 = vadd.f32 %v560, %v660
  %v738 = vadd.f32 %v561, %v662
  %v739 = vadd.f32 %v562, %v665
  %v740 = vadd.f32 %v563, %v667
  %v741 = vadd.f32 %v564, %v670
  %v742 = vadd.f32 %v565, %v672
  %v743 = vadd.f32 %v566, %v675
  %v744 = vadd.f32 %v567, %v677
  %v745 = vadd.f32 %v568, %v680
  %v746 = vadd.f32 %v569, %v682
  %v747 = vmul.f32 %v715, 0.0625
  %v748 = vmul.f32 %v716, 0.0625
  %v749 = vmul.f32 %v717, 0.0625
  %v750 = vmul.f32 %v718, 0.0625
  %v751 = vmul.f32 %v719, 0.0625
  %v752 = vmul.f32 %v720, 0.0625
  %v753 = vmul.f32 %v721, 0.0625
  %v754 = vmul.f32 %v722, 0.0625
  %v755 = vmul.f32 %v723, 0.0625
  %v756 = vmul.f32 %v724, 0.0625
  %v757 = vmul.f32 %v725, 0.0625
  %v758 = vmul.f32 %v726, 0.0625
  %v759 = vmul.f32 %v727, 0.0625
  %v760 = vmul.f32 %v728, 0.0625
  %v761 = vmul.f32 %v729, 0.0625
  %v762 = vmul.f32 %v730, 0.0625
  %v763 = vmul.f32 %v731, 0.0625
  %v764 = vmul.f32 %v732, 0.0625
  %v765 = vmul.f32 %v733, 0.0625
  %v766 = vmul.f32 %v734, 0.0625
  %v767 = vmul.f32 %v735, 0.0625
  %v768 = vmul.f32 %v736, 0.0625
  %v769 = vmul.f32 %v737, 0.0625
  %v770 = vmul.f32 %v738, 0.0625
  %v771 = vmul.f32 %v739, 0.0625
  %v772 = vmul.f32 %v740, 0.0625
  %v773 = vmul.f32 %v741, 0.0625
  %v774 = vmul.f32 %v742, 0.0625
  %v775 = vmul.f32 %v743, 0.0625
  %v776 = vmul.f32 %v744, 0.0625
  %v777 = vmul.f32 %v745, 0.0625
  %v778 = vmul.f32 %v746, 0.0625
  %vm779 = vcmask 64512
  %780 = vst.msk [vmem:[%s1] sm:$0xff] %vm779, %v747
  %781 = vst.msk [vmem:[%s1 + $0x8] sm:$0xff] %vm779, %v748
  %782 = vst.msk [vmem:[%s1 + $0x10] sm:$0xff] %vm779, %v749
  %783 = vst.msk [vmem:[%s1 + $0x18] sm:$0xff] %vm779, %v750
  %784 = vst.msk [vmem:[%s1 + $0x20] sm:$0xff] %vm779, %v751
  %785 = vst.msk [vmem:[%s1 + $0x28] sm:$0xff] %vm779, %v752
  %786 = vst.msk [vmem:[%s1 + $0x30] sm:$0xff] %vm779, %v753
  %787 = vst.msk [vmem:[%s1 + $0x38] sm:$0xff] %vm779, %v754
  %788 = vst.msk [vmem:[%s1 + $0x40] sm:$0xff] %vm779, %v755
  %789 = vst.msk [vmem:[%s1 + $0x48] sm:$0xff] %vm779, %v756
  %790 = vst.msk [vmem:[%s1 + $0x50] sm:$0xff] %vm779, %v757
  %791 = vst.msk [vmem:[%s1 + $0x58] sm:$0xff] %vm779, %v758
  %792 = vst.msk [vmem:[%s1 + $0x60] sm:$0xff] %vm779, %v759
  %793 = vst.msk [vmem:[%s1 + $0x68] sm:$0xff] %vm779, %v760
  %794 = vst.msk [vmem:[%s1 + $0x70] sm:$0xff] %vm779, %v761
  %795 = vst.msk [vmem:[%s1 + $0x78] sm:$0xff] %vm779, %v762
  %796 = vst.msk [vmem:[%s1 + $0x80] sm:$0xff] %vm779, %v763
  %797 = vst.msk [vmem:[%s1 + $0x88] sm:$0xff] %vm779, %v764
  %798 = vst.msk [vmem:[%s1 + $0x90] sm:$0xff] %vm779, %v765
  %799 = vst.msk [vmem:[%s1 + $0x98] sm:$0xff] %vm779, %v766
  %800 = vst.msk [vmem:[%s1 + $0xa0] sm:$0xff] %vm779, %v767
  %801 = vst.msk [vmem:[%s1 + $0xa8] sm:$0xff] %vm779, %v768
  %802 = vst.msk [vmem:[%s1 + $0xb0] sm:$0xff] %vm779, %v769
  %803 = vst.msk [vmem:[%s1 + $0xb8] sm:$0xff] %vm779, %v770
  %804 = vst.msk [vmem:[%s1 + $0xc0] sm:$0xff] %vm779, %v771
  %805 = vst.msk [vmem:[%s1 + $0xc8] sm:$0xff] %vm779, %v772
  %806 = vst.msk [vmem:[%s1 + $0xd0] sm:$0xff] %vm779, %v773
  %807 = vst.msk [vmem:[%s1 + $0xd8] sm:$0xff] %vm779, %v774
  %808 = vst.msk [vmem:[%s1 + $0xe0] sm:$0xff] %vm779, %v775
  %809 = vst.msk [vmem:[%s1 + $0xe8] sm:$0xff] %vm779, %v776
  %810 = vst.msk [vmem:[%s1 + $0xf0] sm:$0xff] %vm779, %v777
  %811 = vst.msk [vmem:[%s1 + $0xf8] sm:$0xff] %vm779, %v778
  // Predicated region
  $region6: #{tpu_custom_call.1} parent=0 // pred_check
    _
  $region7: #{tpu_custom_call.1} parent=0 // pred_check_branch
    %813 = sbr.rel (0) target = $region9
  $region8: #{tpu_custom_call.1} parent=0 // pred_region
    _
  $region9: #{tpu_custom_call.1} parent=0 // pred_fallthru
    _
  // Predicated region
  $region10: #{tpu_custom_call.1} parent=0 // pred_check
    _
  $region11: #{tpu_custom_call.1} parent=0 // pred_check_branch
    %815 = sbr.rel (0) target = $region13
  $region12: #{tpu_custom_call.1} parent=0 // pred_region
    _
  $region13: #{tpu_custom_call.1} parent=0 // pred_fallthru
    _

</llo_original>
